<compile_context>
chip_gen: v7x
topology: tpu7x:2x2x1
jax: 0.10.0
libtpu: 0.0.40
codegen_flags: <defaults>
</compile_context>

<pallas_src>
import numpy as np
import jax
import jax.numpy as jnp
from jax.experimental import pallas as pl
from jax.experimental.pallas import tpu as pltpu

# ---- module configuration (matches MCGate(shape, aux_dim, out_dim, in_dim)) ----
SHAPE = (3, 4)       # gate output shape -> out_shape = (-1, 3, 4)
AUX_DIM = 5
IN_DIM = 3           # mass inputs per timestep   (use_mass = True)
OUT_DIM = 4          # accumulation cells         (use_state = True)
P = int(np.prod(SHAPE))
GATE_DIM = AUX_DIM + IN_DIM + OUT_DIM
GROUPS, GROUP_W = SHAPE                 # softmax: GROUPS contiguous groups of GROUP_W lanes

LANES = 128
PADF = 16                               # features padded 12 -> 16 lanes per sample
SAMPLES_PER_ROW = LANES // PADF         # 8 samples per 128-lane row
MAX_R_BLK = 4096                        # rows of 128 lanes per grid step (= 32768 samples)

# layout invariants the kernel relies on
assert LANES % PADF == 0
assert PADF % GROUP_W == 0              # 4-lane softmax groups never straddle a sample
assert GROUPS * GROUP_W == P <= PADF
assert GATE_DIM <= PADF


def _cdiv(a, b):
    return -(-a // b)


def _round_up(x, m):
    return _cdiv(x, m) * m


def _pick_row_block(rows):
    # >= 2 grid steps whenever the batch allows it (v7x megacore sharding),
    # block rows a multiple of 8 (sublane tile), capped for double-buffered VMEM.
    return min(MAX_R_BLK, _round_up(max(_cdiv(rows, 2), 1), 8))


def mcgate_kernel(x_ref, w_ref, b_ref, s_ref, r1_ref, r2_ref, g_ref, o_ref):
    f32 = jnp.float32
    x = x_ref[...]                                # [R,128]: 8 samples/row, 16 lanes/sample

    # per-sample mass / state sums landed on the mass / state lanes (0 elsewhere) — MXU
    sums = jnp.dot(x, s_ref[...], preferred_element_type=f32)
    scale = jnp.where(sums == 0.0, 1.0, sums)     # zero-sum guard; aux / pad lanes get 1
    x_n = x / scale                               # exact divide, matches torch `xm / scale`

    # fused Linear: block-diagonal [128,128] weight + tiled bias row
    s = jnp.dot(x_n, w_ref[...], preferred_element_type=f32) + b_ref[...]

    # grouped softmax over 4-lane groups.
    # 2-step max butterfly: within-group rotations as exact 0/1 permutation matmuls
    # on the idle MXU, so all lanes of a group carry the identical group max.
    m = jnp.maximum(s, jnp.dot(s, r1_ref[...], preferred_element_type=f32))
    m = jnp.maximum(m, jnp.dot(m, r2_ref[...], preferred_element_type=f32))
    e = jnp.exp(s - m)
    d = jnp.dot(e, g_ref[...], preferred_element_type=f32)   # group denominators

    # exact divide keeps 1e-5 parity with the reference softmax
    o_ref[...] = (e / d).astype(o_ref.dtype)


def _build_constant_operands(weight, bias):
    """Host-side [128,128] operands: block-diag weight, bias row, indicator mats."""
    f32 = jnp.float32

    # 16x16 zero-padded W^T replicated 8x along the block diagonal
    wt = jnp.zeros((PADF, PADF), f32).at[:GATE_DIM, :P].set(weight.T.astype(f32))
    w_block = jnp.kron(jnp.eye(SAMPLES_PER_ROW, dtype=f32), wt)          # [128,128]

    bias_p = jnp.zeros((PADF,), f32).at[:P].set(bias.astype(f32))
    bias_row = jnp.tile(bias_p, SAMPLES_PER_ROW).reshape(1, LANES)       # [1,128]

    # static 0/1 matrices (parameter-independent)
    s16 = np.zeros((PADF, PADF), np.float32)
    s16[AUX_DIM:AUX_DIM + IN_DIM, AUX_DIM:AUX_DIM + IN_DIM] = 1.0        # mass block
    s16[AUX_DIM + IN_DIM:GATE_DIM, AUX_DIM + IN_DIM:GATE_DIM] = 1.0      # state block
    s_norm = np.kron(np.eye(SAMPLES_PER_ROW, dtype=np.float32), s16)

    n_grp = LANES // GROUP_W
    rot1 = np.zeros((GROUP_W, GROUP_W), np.float32)
    rot2 = np.zeros((GROUP_W, GROUP_W), np.float32)
    for j in range(GROUP_W):
        rot1[(j + 1) % GROUP_W, j] = 1.0          # within-group rotate by 1
        rot2[(j + 2) % GROUP_W, j] = 1.0          # within-group rotate by 2
    r1 = np.kron(np.eye(n_grp, dtype=np.float32), rot1)
    r2 = np.kron(np.eye(n_grp, dtype=np.float32), rot2)
    g_sum = np.kron(np.eye(n_grp, dtype=np.float32),
                    np.ones((GROUP_W, GROUP_W), np.float32))

    return (w_block, bias_row, jnp.asarray(s_norm), jnp.asarray(r1),
            jnp.asarray(r2), jnp.asarray(g_sum))


@jax.jit
def mcgate_forward(xm, xa, c, weight, bias):
    """weight: [P, GATE_DIM] (PyTorch nn.Linear layout), bias: [P]."""
    B = xa.shape[0]
    if B == 0:                                    # empty-batch guard (no empty grid)
        return jnp.zeros((0,) + SHAPE, jnp.float32)

    rows = _cdiv(B, SAMPLES_PER_ROW)
    r_blk = _pick_row_block(rows)
    rows_pad = _round_up(rows, r_blk)
    b_pad = rows_pad * SAMPLES_PER_ROW

    f32 = jnp.float32
    # single packed producer: [xa | xm | c | 0pad] -> [B,16]
    feat_pad = jnp.zeros((B, PADF - GATE_DIM), f32)
    packed = jnp.concatenate(
        [xa.astype(f32), xm.astype(f32), c.astype(f32), feat_pad], axis=-1)
    if b_pad != B:
        # zero rows are safe through the zero-sum guard and are sliced off below
        packed = jnp.pad(packed, ((0, b_pad - B), (0, 0)))
    packed = packed.reshape(rows_pad, LANES)      # free row-major reshape: 8 samples/row

    w_block, bias_row, s_norm, r1, r2, g_sum = _build_constant_operands(weight, bias)

    const_spec = pl.BlockSpec((LANES, LANES), lambda i: (0, 0))   # resident constants
    out2d = pl.pallas_call(
        mcgate_kernel,
        out_shape=jax.ShapeDtypeStruct((rows_pad, LANES), f32),
        grid=(rows_pad // r_blk,),
        in_specs=[
            pl.BlockSpec((r_blk, LANES), lambda i: (i, 0)),       # packed inputs
            const_spec,                                           # block-diag weight
            pl.BlockSpec((1, LANES), lambda i: (0, 0)),           # bias row
            const_spec,                                           # S  (norm sums)
            const_spec,                                           # R1 (rot by 1)
            const_spec,                                           # R2 (rot by 2)
            const_spec,                                           # G  (denominators)
        ],
        out_specs=pl.BlockSpec((r_blk, LANES), lambda i: (i, 0)),
        compiler_params=pltpu.CompilerParams(
            dimension_semantics=("parallel",)),                   # megacore on v7x
    )(packed, w_block, bias_row, s_norm, r1, r2, g_sum)

    # glue: drop feature / batch padding and view to the PyTorch out_shape (-1, *shape)
    out = out2d.reshape(b_pad, PADF)[:B, :P]
    return out.reshape((-1,) + SHAPE)


def mcgate_reference(xm, xa, c, weight, bias):
    """Pure-JAX reference mirroring the PyTorch forward."""
    xm_sum = jnp.sum(xm, axis=-1, keepdims=True)
    xm_n = xm / jnp.where(xm_sum == 0.0, jnp.ones_like(xm_sum), xm_sum)
    c_sum = jnp.sum(c, axis=-1, keepdims=True)
    c_n = c / jnp.where(c_sum == 0.0, jnp.ones_like(c_sum), c_sum)
    x_ = jnp.concatenate([xa, xm_n, c_n], axis=-1)
    s = x_ @ weight.T + bias
    s = s.reshape((-1,) + SHAPE)
    return jax.nn.softmax(s, axis=-1)


if __name__ == "__main__":
    B = 2
    key = jax.random.PRNGKey(0)
    k_xm, k_xa, k_c, k_w = jax.random.split(key, 4)

    xm = jax.random.uniform(k_xm, (B, IN_DIM), dtype=jnp.float32)
    xm = xm.at[0].set(0.0)  # exercise the zero-sum guard path
    xa = jax.random.normal(k_xa, (B, AUX_DIM), dtype=jnp.float32)
    c = jax.random.uniform(k_c, (B, OUT_DIM), dtype=jnp.float32)

    # deterministic "orthogonal-like" weight init (mimics reset_parameters),
    # zero bias; synthetic parameters, not a checkpoint load.
    a = jax.random.normal(k_w, (P, GATE_DIM), dtype=jnp.float32)
    q, r = jnp.linalg.qr(a)
    q = q * jnp.sign(jnp.diag(r))[None, :]
    weight = q.astype(jnp.float32)              # [P, GATE_DIM]
    bias = jnp.zeros((P,), dtype=jnp.float32)   # [P]

    out = mcgate_forward(xm, xa, c, weight, bias)
    out = jax.block_until_ready(out)

    ref = mcgate_reference(xm, xa, c, weight, bias)
    assert out.shape == (B,) + SHAPE
    assert np.allclose(np.asarray(out), np.asarray(ref), atol=1e-5, rtol=1e-5)
    # rows of the gate must sum to 1 (softmax normaliser)
    assert np.allclose(np.asarray(out).sum(-1), 1.0, atol=1e-5)

    print("KERNEL_OK")
</pallas_src>

<mosaic_0001>
module attributes {stable_mosaic.version = 11 : i64} {
  func.func @mcgate_kernel(%arg0: i32, %arg1: memref<8x128xf32, #tpu.memory_space<vmem>>, %arg2: memref<128x128xf32, #tpu.memory_space<vmem>>, %arg3: memref<1x128xf32, #tpu.memory_space<vmem>>, %arg4: memref<128x128xf32, #tpu.memory_space<vmem>>, %arg5: memref<128x128xf32, #tpu.memory_space<vmem>>, %arg6: memref<128x128xf32, #tpu.memory_space<vmem>>, %arg7: memref<128x128xf32, #tpu.memory_space<vmem>>, %arg8: memref<8x128xf32, #tpu.memory_space<vmem>>) attributes {dimension_semantics = [#tpu.dimension_semantics<parallel>], iteration_bounds = array<i64: 1>, scalar_prefetch = 0 : i64, scratch_operands = 0 : i64, tpu.core_type = #tpu.core_type<tc>, window_params = [{transform_indices = @transform_0, window_bounds = array<i64: 8, 128>}, {pipeline_mode = #tpu.pipeline_mode<synchronous>, transform_indices = @transform_1, window_bounds = array<i64: 128, 128>}, {pipeline_mode = #tpu.pipeline_mode<synchronous>, transform_indices = @transform_2, window_bounds = array<i64: 1, 128>}, {pipeline_mode = #tpu.pipeline_mode<synchronous>, transform_indices = @transform_3, window_bounds = array<i64: 128, 128>}, {pipeline_mode = #tpu.pipeline_mode<synchronous>, transform_indices = @transform_4, window_bounds = array<i64: 128, 128>}, {pipeline_mode = #tpu.pipeline_mode<synchronous>, transform_indices = @transform_5, window_bounds = array<i64: 128, 128>}, {pipeline_mode = #tpu.pipeline_mode<synchronous>, transform_indices = @transform_6, window_bounds = array<i64: 128, 128>}, {transform_indices = @transform_7, window_bounds = array<i64: 8, 128>}]} {
    %c0 = arith.constant 0 : index
    %c0_0 = arith.constant 0 : index
    %0 = vector.load %arg1[%c0, %c0_0] : memref<8x128xf32, #tpu.memory_space<vmem>>, vector<8x128xf32>
    %c0_1 = arith.constant 0 : index
    %c0_2 = arith.constant 0 : index
    %1 = vector.load %arg4[%c0_1, %c0_2] : memref<128x128xf32, #tpu.memory_space<vmem>>, vector<128x128xf32>
    %cst = arith.constant dense<0.000000e+00> : vector<8x128xf32>
    %2 = tpu.matmul %0, %1, %cst {dimension_numbers = #tpu.dot_dimension_numbers<[1], [0], [0], [1], [0, 0, 1, 1], [], []>} : vector<8x128xf32>, vector<128x128xf32>, vector<8x128xf32> -> vector<8x128xf32>
    %cst_3 = arith.constant 0.000000e+00 : f32
    %3 = vector.broadcast %cst_3 : f32 to vector<8x128xf32>
    %4 = arith.cmpf oeq, %2, %3 : vector<8x128xf32>
    %cst_4 = arith.constant 1.000000e+00 : f32
    %5 = vector.broadcast %cst_4 : f32 to vector<8x128xf32>
    %6 = arith.select %4, %5, %2 : vector<8x128xi1>, vector<8x128xf32>
    %7 = arith.divf %0, %6 : vector<8x128xf32>
    %c0_5 = arith.constant 0 : index
    %c0_6 = arith.constant 0 : index
    %8 = vector.load %arg2[%c0_5, %c0_6] : memref<128x128xf32, #tpu.memory_space<vmem>>, vector<128x128xf32>
    %cst_7 = arith.constant dense<0.000000e+00> : vector<8x128xf32>
    %9 = tpu.matmul %7, %8, %cst_7 {dimension_numbers = #tpu.dot_dimension_numbers<[1], [0], [0], [1], [0, 0, 1, 1], [], []>} : vector<8x128xf32>, vector<128x128xf32>, vector<8x128xf32> -> vector<8x128xf32>
    %c0_8 = arith.constant 0 : index
    %c0_9 = arith.constant 0 : index
    %10 = vector.load %arg3[%c0_8, %c0_9] : memref<1x128xf32, #tpu.memory_space<vmem>>, vector<1x128xf32>
    %11 = vector.broadcast %10 : vector<1x128xf32> to vector<8x128xf32>
    %12 = arith.addf %9, %11 : vector<8x128xf32>
    %c0_10 = arith.constant 0 : index
    %c0_11 = arith.constant 0 : index
    %13 = vector.load %arg5[%c0_10, %c0_11] : memref<128x128xf32, #tpu.memory_space<vmem>>, vector<128x128xf32>
    %cst_12 = arith.constant dense<0.000000e+00> : vector<8x128xf32>
    %14 = tpu.matmul %12, %13, %cst_12 {dimension_numbers = #tpu.dot_dimension_numbers<[1], [0], [0], [1], [0, 0, 1, 1], [], []>} : vector<8x128xf32>, vector<128x128xf32>, vector<8x128xf32> -> vector<8x128xf32>
    %15 = arith.maximumf %12, %14 : vector<8x128xf32>
    %c0_13 = arith.constant 0 : index
    %c0_14 = arith.constant 0 : index
    %16 = vector.load %arg6[%c0_13, %c0_14] : memref<128x128xf32, #tpu.memory_space<vmem>>, vector<128x128xf32>
    %cst_15 = arith.constant dense<0.000000e+00> : vector<8x128xf32>
    %17 = tpu.matmul %15, %16, %cst_15 {dimension_numbers = #tpu.dot_dimension_numbers<[1], [0], [0], [1], [0, 0, 1, 1], [], []>} : vector<8x128xf32>, vector<128x128xf32>, vector<8x128xf32> -> vector<8x128xf32>
    %18 = arith.maximumf %15, %17 : vector<8x128xf32>
    %19 = arith.subf %12, %18 : vector<8x128xf32>
    %20 = math.exp %19 : vector<8x128xf32>
    %c0_16 = arith.constant 0 : index
    %c0_17 = arith.constant 0 : index
    %21 = vector.load %arg7[%c0_16, %c0_17] : memref<128x128xf32, #tpu.memory_space<vmem>>, vector<128x128xf32>
    %cst_18 = arith.constant dense<0.000000e+00> : vector<8x128xf32>
    %22 = tpu.matmul %20, %21, %cst_18 {dimension_numbers = #tpu.dot_dimension_numbers<[1], [0], [0], [1], [0, 0, 1, 1], [], []>} : vector<8x128xf32>, vector<128x128xf32>, vector<8x128xf32> -> vector<8x128xf32>
    %23 = arith.divf %20, %22 : vector<8x128xf32>
    %c0_19 = arith.constant 0 : index
    %c0_20 = arith.constant 0 : index
    %24 = vector.load %arg8[%c0_19, %c0_20] : memref<8x128xf32, #tpu.memory_space<vmem>>, vector<8x128xf32>
    tpu.vector_store %arg8[%c0_19, %c0_20], %23 {strides = array<i32>} : memref<8x128xf32, #tpu.memory_space<vmem>>, vector<8x128xf32>,
    return
  }
  func.func @transform_0(%arg0: i32) -> (i32, i32) {
    %c0_i32 = arith.constant 0 : i32
    %c0_i32_0 = arith.constant 0 : i32
    return %arg0, %c0_i32 : i32, i32
  }
  func.func @transform_1(%arg0: i32) -> (i32, i32) {
    %c0_i32 = arith.constant 0 : i32
    %c0_i32_0 = arith.constant 0 : i32
    %c0_i32_1 = arith.constant 0 : i32
    return %c0_i32, %c0_i32_0 : i32, i32
  }
  func.func @transform_2(%arg0: i32) -> (i32, i32) {
    %c0_i32 = arith.constant 0 : i32
    %c0_i32_0 = arith.constant 0 : i32
    %c0_i32_1 = arith.constant 0 : i32
    return %c0_i32, %c0_i32_0 : i32, i32
  }
  func.func @transform_3(%arg0: i32) -> (i32, i32) {
    %c0_i32 = arith.constant 0 : i32
    %c0_i32_0 = arith.constant 0 : i32
    %c0_i32_1 = arith.constant 0 : i32
    return %c0_i32, %c0_i32_0 : i32, i32
  }
  func.func @transform_4(%arg0: i32) -> (i32, i32) {
    %c0_i32 = arith.constant 0 : i32
    %c0_i32_0 = arith.constant 0 : i32
    %c0_i32_1 = arith.constant 0 : i32
    return %c0_i32, %c0_i32_0 : i32, i32
  }
  func.func @transform_5(%arg0: i32) -> (i32, i32) {
    %c0_i32 = arith.constant 0 : i32
    %c0_i32_0 = arith.constant 0 : i32
    %c0_i32_1 = arith.constant 0 : i32
    return %c0_i32, %c0_i32_0 : i32, i32
  }
  func.func @transform_6(%arg0: i32) -> (i32, i32) {
    %c0_i32 = arith.constant 0 : i32
    %c0_i32_0 = arith.constant 0 : i32
    %c0_i32_1 = arith.constant 0 : i32
    return %c0_i32, %c0_i32_0 : i32, i32
  }
  func.func @transform_7(%arg0: i32) -> (i32, i32) {
    %c0_i32 = arith.constant 0 : i32
    %c0_i32_0 = arith.constant 0 : i32
    return %arg0, %c0_i32 : i32, i32
  }
}

</mosaic_0001>

<llo_original>
// kernel: tile.8
$region0: #{tile.8}
  #allocation0 [shape = 's32[1]{0}', space=sflag, size = 0x4, scoped, tag = 'scoped memory for tile.8']
  %s0 = inlined_call_operand.vmem [shape: f32[16], index: 0, kind: input, shape index: {}]
  %s1 = inlined_call_operand.vmem [shape: f32[8,16], index: 1, kind: output, shape index: {}]
  // Predicated region
  $region2: #{tile.8} parent=0 // pred_check
    _
  $region3: #{tile.8} parent=0 // pred_check_branch
    %3 = sbr.rel (0) target = $region5
  $region4: #{tile.8} parent=0 // pred_region
    _
  $region5: #{tile.8} parent=0 // pred_fallthru
    _
  %v4 = vld [vmem:[%s0] ss:$0 sm:$0xff]
  %5 = vst [vmem:[%s1] sm:$0xff] %v4

// kernel: tile.9
$region0: #{tile.9}
  %s0 = inlined_call_operand.vmem [shape: f32[8,16], index: 0, kind: input, shape index: {}]
  %s1 = inlined_call_operand.vmem [shape: f32[1,128], index: 1, kind: output, shape index: {}]
  $region1: #{tile.9} parent=0
    #allocation0 [shape = 'u8[4096]{0}', space=vmem, size = 0x1000, scoped, tag = 'scoped mem for output reshape']
    %v2 = vld [vmem:[%s0] sm:$0x1]
    %vm3 = vcmask 130048
    %4 = vst.msk [vmem:[#allocation0] sm:$0x1] %vm3, %v2
    %s5 = scalar_lea.vmem %s0, 7
    %v6 = vld [vmem:[%s5] sm:$0x1]
    %7 = vrot.lane.b32.xlu0 %v6, 112
    %v8 = vpop.permute.xlu0 %7
    %vm9 = vcmask 1048448
    %10 = vst.msk [vmem:[#allocation0] sm:$0x1] %vm9, %v8
    %s11 = scalar_lea.vmem %s0, 6
    %v12 = vld [vmem:[%s11] sm:$0x1]
    %13 = vrot.lane.b32.xlu0 %v12, 96
    %v14 = vpop.permute.xlu0 %13
    %vm15 = vcmask 917248
    %16 = vst.msk [vmem:[#allocation0] sm:$0x1] %vm15, %v14
    %s17 = scalar_lea.vmem %s0, 5
    %v18 = vld [vmem:[%s17] sm:$0x1]
    %19 = vrot.lane.b32.xlu0 %v18, 80
    %v20 = vpop.permute.xlu0 %19
    %vm21 = vcmask 786048
    %22 = vst.msk [vmem:[#allocation0] sm:$0x1] %vm21, %v20
    %s23 = scalar_lea.vmem %s0, 4
    %v24 = vld [vmem:[%s23] sm:$0x1]
    %25 = vrot.lane.b32.xlu0 %v24, 64
    %v26 = vpop.permute.xlu0 %25
    %vm27 = vcmask 654848
    %28 = vst.msk [vmem:[#allocation0] sm:$0x1] %vm27, %v26
    %s29 = scalar_lea.vmem %s0, 3
    %v30 = vld [vmem:[%s29] sm:$0x1]
    %31 = vrot.lane.b32.xlu0 %v30, 48
    %v32 = vpop.permute.xlu0 %31
    %vm33 = vcmask 523648
    %34 = vst.msk [vmem:[#allocation0] sm:$0x1] %vm33, %v32
    %s35 = scalar_lea.vmem %s0, 2
    %v36 = vld [vmem:[%s35] sm:$0x1]
    %37 = vrot.lane.b32.xlu0 %v36, 32
    %v38 = vpop.permute.xlu0 %37
    %vm39 = vcmask 392448
    %40 = vst.msk [vmem:[#allocation0] sm:$0x1] %vm39, %v38
    %s41 = scalar_lea.vmem %s0, 1
    %v42 = vld [vmem:[%s41] sm:$0x1]
    %43 = vrot.lane.b32.xlu0 %v42, 16
    %v44 = vpop.permute.xlu0 %43
    %vm45 = vcmask 261248
    %46 = vst.msk [vmem:[#allocation0] sm:$0x1] %vm45, %v44
    %s48 = sshllo.u32 0, 1
    %v50 = vld [vmem:[#allocation0] sm:%s48]
    %s51 = sshllo.u32 0, 1
    %52 = vst [vmem:[%s1] sm:%s51] %v50

// kernel: mcgate_forward.1
$region0: #{mcgate_forward.1}
  #allocation0 [shape = 'u32[]', space=smem, size = 0x4, offset = 0x4, fixed_abs, tag = 'smem constant byte address 0x4 - core index']
  #allocation1 [shape = 'u32[144,128]{1,0:T(1,128)}', space=vmem, size = 0x12000, scoped, tag = 'internal scratch']
  %s0 = inlined_call_operand.vmem [shape: f32[8,128], index: 0, kind: input, shape index: {}]
  %s1 = inlined_call_operand.vmem [shape: f32[128,128], index: 1, kind: input, shape index: {}]
  %s2 = inlined_call_operand.vmem [shape: f32[1,128], index: 2, kind: input, shape index: {}]
  %s3 = inlined_call_operand.vmem [shape: f32[128,128], index: 3, kind: input, shape index: {}]
  %s4 = inlined_call_operand.vmem [shape: f32[128,128], index: 4, kind: input, shape index: {}]
  %s5 = inlined_call_operand.vmem [shape: f32[128,128], index: 5, kind: input, shape index: {}]
  %s6 = inlined_call_operand.vmem [shape: f32[128,128], index: 6, kind: input, shape index: {}]
  %s7 = inlined_call_operand.vmem [shape: f32[8,128], index: 7, kind: output, shape index: {}]
  %s8 = sld [smem:[#allocation0]]
  $region38: #{mcgate_forward.1} parent=0
    _
  %s10 = ssub.s32 1, %s8
  %s11 = scalar_select 0, %s10, %s8
  // Predicated region
  $region2: #{mcgate_forward.1} parent=0 // pred_check
    _
  $region3: #{mcgate_forward.1} parent=0 // pred_check_branch
    %13 = sbr.rel (0) target = $region5
  $region4: #{mcgate_forward.1} parent=0 // pred_region
    _
  $region5: #{mcgate_forward.1} parent=0 // pred_fallthru
    _
  // Predicated region
  $region6: #{mcgate_forward.1} parent=0 // pred_check
    _
  $region7: #{mcgate_forward.1} parent=0 // pred_check_branch
    %15 = sbr.rel (0) target = $region9
  $region8: #{mcgate_forward.1} parent=0 // pred_region
    _
  $region9: #{mcgate_forward.1} parent=0 // pred_fallthru
    _
  // Predicated region
  $region10: #{mcgate_forward.1} parent=0 // pred_check
    _
  $region11: #{mcgate_forward.1} parent=0 // pred_check_branch
    %17 = sbr.rel (0) target = $region13
  $region12: #{mcgate_forward.1} parent=0 // pred_region
    _
  $region13: #{mcgate_forward.1} parent=0 // pred_fallthru
    _
  // Predicated region
  $region14: #{mcgate_forward.1} parent=0 // pred_check
    _
  $region15: #{mcgate_forward.1} parent=0 // pred_check_branch
    %19 = sbr.rel (0) target = $region17
  $region16: #{mcgate_forward.1} parent=0 // pred_region
    _
  $region17: #{mcgate_forward.1} parent=0 // pred_fallthru
    _
  // Predicated region
  $region18: #{mcgate_forward.1} parent=0 // pred_check
    _
  $region19: #{mcgate_forward.1} parent=0 // pred_check_branch
    %21 = sbr.rel (0) target = $region21
  $region20: #{mcgate_forward.1} parent=0 // pred_region
    _
  $region21: #{mcgate_forward.1} parent=0 // pred_fallthru
    _
  // Predicated region
  $region22: #{mcgate_forward.1} parent=0 // pred_check
    _
  $region23: #{mcgate_forward.1} parent=0 // pred_check_branch
    %23 = sbr.rel (0) target = $region25
  $region24: #{mcgate_forward.1} parent=0 // pred_region
    _
  $region25: #{mcgate_forward.1} parent=0 // pred_fallthru
    _
  // Predicated region
  $region26: #{mcgate_forward.1} parent=0 // pred_check
    _
  $region27: #{mcgate_forward.1} parent=0 // pred_check_branch
    %25 = sbr.rel (0) target = $region29
  $region28: #{mcgate_forward.1} parent=0 // pred_region
    _
  $region29: #{mcgate_forward.1} parent=0 // pred_fallthru
    _
  %v26 = vld [vmem:[%s0] sm:$0xff]
  %v27 = vld [vmem:[%s3] sm:$0xff]
  %v28 = vld [vmem:[%s3 + $0x8] sm:$0xff]
  %v29 = vld [vmem:[%s3 + $0x10] sm:$0xff]
  %v30 = vld [vmem:[%s3 + $0x18] sm:$0xff]
  %v31 = vld [vmem:[%s3 + $0x20] sm:$0xff]
  %v32 = vld [vmem:[%s3 + $0x28] sm:$0xff]
  %v33 = vld [vmem:[%s3 + $0x30] sm:$0xff]
  %v34 = vld [vmem:[%s3 + $0x38] sm:$0xff]
  %v35 = vld [vmem:[%s3 + $0x40] sm:$0xff]
  %v36 = vld [vmem:[%s3 + $0x48] sm:$0xff]
  %v37 = vld [vmem:[%s3 + $0x50] sm:$0xff]
  %v38 = vld [vmem:[%s3 + $0x58] sm:$0xff]
  %v39 = vld [vmem:[%s3 + $0x60] sm:$0xff]
  %v40 = vld [vmem:[%s3 + $0x68] sm:$0xff]
  %v41 = vld [vmem:[%s3 + $0x70] sm:$0xff]
  %v42 = vld [vmem:[%s3 + $0x78] sm:$0xff]
  %43 = vmatprep.subr.mxu0 0.0
  %44 = vmatpush1.msra.mxu0 %v27
  %45 = vmatprep.subr.mxu0 0.0
  %46 = vmatpush1.msra.mxu0 %v28
  %47 = vmatprep.subr.mxu0 0.0
  %48 = vmatpush1.msra.mxu0 %v29
  %49 = vmatprep.subr.mxu0 0.0
  %50 = vmatpush1.msra.mxu0 %v30
  %51 = vmatprep.subr.mxu0 0.0
  %52 = vmatpush1.msra.mxu0 %v31
  %53 = vmatprep.subr.mxu0 0.0
  %54 = vmatpush1.msra.mxu0 %v32
  %55 = vmatprep.subr.mxu0 0.0
  %56 = vmatpush1.msra.mxu0 %v33
  %57 = vmatprep.subr.mxu0 0.0
  %58 = vmatpush1.msra.mxu0 %v34
  %59 = vmatprep.subr.mxu0 0.0
  %60 = vmatpush1.msra.mxu0 %v35
  %61 = vmatprep.subr.mxu0 0.0
  %62 = vmatpush1.msra.mxu0 %v36
  %63 = vmatprep.subr.mxu0 0.0
  %64 = vmatpush1.msra.mxu0 %v37
  %65 = vmatprep.subr.mxu0 0.0
  %66 = vmatpush1.msra.mxu0 %v38
  %67 = vmatprep.subr.mxu0 0.0
  %68 = vmatpush1.msra.mxu0 %v39
  %69 = vmatprep.subr.mxu0 0.0
  %70 = vmatpush1.msra.mxu0 %v40
  %71 = vmatprep.subr.mxu0 0.0
  %72 = vmatpush1.msra.mxu0 %v41
  %73 = vmatprep.subr.mxu0 0.0
  %74 = vmatpush1.msra.mxu0 %v42
  %75 = vmatprep.subr.mxu0 0.0
  %76 = vmatpush1.msra.mxu0 0.0
  %77 = vmatprep.subr.mxu0 0.0
  %78 = vmatpush1.msra.mxu0 0.0
  %79 = vmatprep.subr.mxu0 0.0
  %80 = vmatpush1.msra.mxu0 0.0
  %81 = vmatprep.subr.mxu0 0.0
  %82 = vmatpush1.msra.mxu0 0.0
  %83 = vmatprep.subr.mxu0 0.0
  %84 = vmatpush1.msra.mxu0 0.0
  %85 = vmatprep.subr.mxu0 0.0
  %86 = vmatpush1.msra.mxu0 0.0
  %87 = vmatprep.subr.mxu0 0.0
  %88 = vmatpush1.msra.mxu0 0.0
  %89 = vmatprep.subr.mxu0 0.0
  %90 = vmatpush1.msra.mxu0 0.0
  %91 = vmatprep.subr.mxu0 0.0
  %92 = vmatpush1.msra.mxu0 0.0
  %93 = vmatprep.subr.mxu0 0.0
  %94 = vmatpush1.msra.mxu0 0.0
  %95 = vmatprep.subr.mxu0 0.0
  %96 = vmatpush1.msra.mxu0 0.0
  %97 = vmatprep.subr.mxu0 0.0
  %98 = vmatpush1.msra.mxu0 0.0
  %99 = vmatprep.subr.mxu0 0.0
  %100 = vmatpush1.msra.mxu0 0.0
  %101 = vmatprep.subr.mxu0 0.0
  %102 = vmatpush1.msra.mxu0 0.0
  %103 = vmatprep.subr.mxu0 0.0
  %104 = vmatpush1.msra.mxu0 0.0
  %105 = vmatprep.subr.mxu0 0.0
  %106 = vmatpush1.msra.mxu0 0.0
  %107 = vmatprep.mubr.f32.mxu0 0.0
  %108 = vmatmul.mubr.f32.gmra.mrb[0].mxu0 %v26
  %v109 = vpop.f32.mrb[0].mxu0
  %v110 = vadd.f32 0.0, %v109
  %v111 = vpop.f32.mrb[0].mxu0
  %112 = vdwg.mxu0
  %vm113 = vcmp.eq.f32.partialorder %v110, 0.0
  %v114 = vsel %vm113, 1.0, %v110
  %v115 = vrcp.pop %v114
  %v116 = vmul.f32 %v26, %v115
  %v117 = vld [vmem:[%s1] sm:$0xff]
  %v118 = vld [vmem:[%s1 + $0x8] sm:$0xff]
  %v119 = vld [vmem:[%s1 + $0x10] sm:$0xff]
  %v120 = vld [vmem:[%s1 + $0x18] sm:$0xff]
  %v121 = vld [vmem:[%s1 + $0x20] sm:$0xff]
  %v122 = vld [vmem:[%s1 + $0x28] sm:$0xff]
  %v123 = vld [vmem:[%s1 + $0x30] sm:$0xff]
  %v124 = vld [vmem:[%s1 + $0x38] sm:$0xff]
  %v125 = vld [vmem:[%s1 + $0x40] sm:$0xff]
  %v126 = vld [vmem:[%s1 + $0x48] sm:$0xff]
  %v127 = vld [vmem:[%s1 + $0x50] sm:$0xff]
  %v128 = vld [vmem:[%s1 + $0x58] sm:$0xff]
  %v129 = vld [vmem:[%s1 + $0x60] sm:$0xff]
  %v130 = vld [vmem:[%s1 + $0x68] sm:$0xff]
  %v131 = vld [vmem:[%s1 + $0x70] sm:$0xff]
  %v132 = vld [vmem:[%s1 + $0x78] sm:$0xff]
  %v133 = vld [vmem:[%s2] sm:$0x1]
  %v135 = vlaneseq
  %v136 = vshrl.u32 %v135, 7
  %v137 = vsub.s32 0, %v136
  %v138 = vrot.slane %v133, %v137
  %140 = vmatprep.subr.mxu0 0.0
  %141 = vmatpush1.msra.mxu0 %v117
  %142 = vmatprep.subr.mxu0 0.0
  %143 = vmatpush1.msra.mxu0 %v118
  %144 = vmatprep.subr.mxu0 0.0
  %145 = vmatpush1.msra.mxu0 %v119
  %146 = vmatprep.subr.mxu0 0.0
  %147 = vmatpush1.msra.mxu0 %v120
  %148 = vmatprep.subr.mxu0 0.0
  %149 = vmatpush1.msra.mxu0 %v121
  %150 = vmatprep.subr.mxu0 0.0
  %151 = vmatpush1.msra.mxu0 %v122
  %152 = vmatprep.subr.mxu0 0.0
  %153 = vmatpush1.msra.mxu0 %v123
  %154 = vmatprep.subr.mxu0 0.0
  %155 = vmatpush1.msra.mxu0 %v124
  %156 = vmatprep.subr.mxu0 0.0
  %157 = vmatpush1.msra.mxu0 %v125
  %158 = vmatprep.subr.mxu0 0.0
  %159 = vmatpush1.msra.mxu0 %v126
  %160 = vmatprep.subr.mxu0 0.0
  %161 = vmatpush1.msra.mxu0 %v127
  %162 = vmatprep.subr.mxu0 0.0
  %163 = vmatpush1.msra.mxu0 %v128
  %164 = vmatprep.subr.mxu0 0.0
  %165 = vmatpush1.msra.mxu0 %v129
  %166 = vmatprep.subr.mxu0 0.0
  %167 = vmatpush1.msra.mxu0 %v130
  %168 = vmatprep.subr.mxu0 0.0
  %169 = vmatpush1.msra.mxu0 %v131
  %170 = vmatprep.subr.mxu0 0.0
  %171 = vmatpush1.msra.mxu0 %v132
  %172 = vmatprep.subr.mxu0 0.0
  %173 = vmatpush1.msra.mxu0 0.0
  %174 = vmatprep.subr.mxu0 0.0
  %175 = vmatpush1.msra.mxu0 0.0
  %176 = vmatprep.subr.mxu0 0.0
  %177 = vmatpush1.msra.mxu0 0.0
  %178 = vmatprep.subr.mxu0 0.0
  %179 = vmatpush1.msra.mxu0 0.0
  %180 = vmatprep.subr.mxu0 0.0
  %181 = vmatpush1.msra.mxu0 0.0
  %182 = vmatprep.subr.mxu0 0.0
  %183 = vmatpush1.msra.mxu0 0.0
  %184 = vmatprep.subr.mxu0 0.0
  %185 = vmatpush1.msra.mxu0 0.0
  %186 = vmatprep.subr.mxu0 0.0
  %187 = vmatpush1.msra.mxu0 0.0
  %188 = vmatprep.subr.mxu0 0.0
  %189 = vmatpush1.msra.mxu0 0.0
  %190 = vmatprep.subr.mxu0 0.0
  %191 = vmatpush1.msra.mxu0 0.0
  %192 = vmatprep.subr.mxu0 0.0
  %193 = vmatpush1.msra.mxu0 0.0
  %194 = vmatprep.subr.mxu0 0.0
  %195 = vmatpush1.msra.mxu0 0.0
  %196 = vmatprep.subr.mxu0 0.0
  %197 = vmatpush1.msra.mxu0 0.0
  %198 = vmatprep.subr.mxu0 0.0
  %199 = vmatpush1.msra.mxu0 0.0
  %200 = vmatprep.subr.mxu0 0.0
  %201 = vmatpush1.msra.mxu0 0.0
  %202 = vmatprep.subr.mxu0 0.0
  %203 = vmatpush1.msra.mxu0 0.0
  %204 = vmatprep.mubr.f32.mxu0 0.0
  %205 = vmatmul.mubr.f32.gmra.mrb[0].mxu0 %v116
  %v206 = vpop.f32.mrb[0].mxu0
  %v207 = vadd.f32 %v138, %v206
  %v208 = vpop.f32.mrb[0].mxu0
  %209 = vdwg.mxu0
  %v210 = vld [vmem:[%s4] sm:$0xff]
  %v211 = vld [vmem:[%s4 + $0x8] sm:$0xff]
  %v212 = vld [vmem:[%s4 + $0x10] sm:$0xff]
  %v213 = vld [vmem:[%s4 + $0x18] sm:$0xff]
  %v214 = vld [vmem:[%s4 + $0x20] sm:$0xff]
  %v215 = vld [vmem:[%s4 + $0x28] sm:$0xff]
  %v216 = vld [vmem:[%s4 + $0x30] sm:$0xff]
  %v217 = vld [vmem:[%s4 + $0x38] sm:$0xff]
  %v218 = vld [vmem:[%s4 + $0x40] sm:$0xff]
  %v219 = vld [vmem:[%s4 + $0x48] sm:$0xff]
  %v220 = vld [vmem:[%s4 + $0x50] sm:$0xff]
  %v221 = vld [vmem:[%s4 + $0x58] sm:$0xff]
  %v222 = vld [vmem:[%s4 + $0x60] sm:$0xff]
  %v223 = vld [vmem:[%s4 + $0x68] sm:$0xff]
  %v224 = vld [vmem:[%s4 + $0x70] sm:$0xff]
  %v225 = vld [vmem:[%s4 + $0x78] sm:$0xff]
  %226 = vmatprep.subr.mxu0 0.0
  %227 = vmatpush1.msra.mxu0 %v210
  %228 = vmatprep.subr.mxu0 0.0
  %229 = vmatpush1.msra.mxu0 %v211
  %230 = vmatprep.subr.mxu0 0.0
  %231 = vmatpush1.msra.mxu0 %v212
  %232 = vmatprep.subr.mxu0 0.0
  %233 = vmatpush1.msra.mxu0 %v213
  %234 = vmatprep.subr.mxu0 0.0
  %235 = vmatpush1.msra.mxu0 %v214
  %236 = vmatprep.subr.mxu0 0.0
  %237 = vmatpush1.msra.mxu0 %v215
  %238 = vmatprep.subr.mxu0 0.0
  %239 = vmatpush1.msra.mxu0 %v216
  %240 = vmatprep.subr.mxu0 0.0
  %241 = vmatpush1.msra.mxu0 %v217
  %242 = vmatprep.subr.mxu0 0.0
  %243 = vmatpush1.msra.mxu0 %v218
  %244 = vmatprep.subr.mxu0 0.0
  %245 = vmatpush1.msra.mxu0 %v219
  %246 = vmatprep.subr.mxu0 0.0
  %247 = vmatpush1.msra.mxu0 %v220
  %248 = vmatprep.subr.mxu0 0.0
  %249 = vmatpush1.msra.mxu0 %v221
  %250 = vmatprep.subr.mxu0 0.0
  %251 = vmatpush1.msra.mxu0 %v222
  %252 = vmatprep.subr.mxu0 0.0
  %253 = vmatpush1.msra.mxu0 %v223
  %254 = vmatprep.subr.mxu0 0.0
  %255 = vmatpush1.msra.mxu0 %v224
  %256 = vmatprep.subr.mxu0 0.0
  %257 = vmatpush1.msra.mxu0 %v225
  %258 = vmatprep.subr.mxu0 0.0
  %259 = vmatpush1.msra.mxu0 0.0
  %260 = vmatprep.subr.mxu0 0.0
  %261 = vmatpush1.msra.mxu0 0.0
  %262 = vmatprep.subr.mxu0 0.0
  %263 = vmatpush1.msra.mxu0 0.0
  %264 = vmatprep.subr.mxu0 0.0
  %265 = vmatpush1.msra.mxu0 0.0
  %266 = vmatprep.subr.mxu0 0.0
  %267 = vmatpush1.msra.mxu0 0.0
  %268 = vmatprep.subr.mxu0 0.0
  %269 = vmatpush1.msra.mxu0 0.0
  %270 = vmatprep.subr.mxu0 0.0
  %271 = vmatpush1.msra.mxu0 0.0
  %272 = vmatprep.subr.mxu0 0.0
  %273 = vmatpush1.msra.mxu0 0.0
  %274 = vmatprep.subr.mxu0 0.0
  %275 = vmatpush1.msra.mxu0 0.0
  %276 = vmatprep.subr.mxu0 0.0
  %277 = vmatpush1.msra.mxu0 0.0
  %278 = vmatprep.subr.mxu0 0.0
  %279 = vmatpush1.msra.mxu0 0.0
  %280 = vmatprep.subr.mxu0 0.0
  %281 = vmatpush1.msra.mxu0 0.0
  %282 = vmatprep.subr.mxu0 0.0
  %283 = vmatpush1.msra.mxu0 0.0
  %284 = vmatprep.subr.mxu0 0.0
  %285 = vmatpush1.msra.mxu0 0.0
  %286 = vmatprep.subr.mxu0 0.0
  %287 = vmatpush1.msra.mxu0 0.0
  %288 = vmatprep.subr.mxu0 0.0
  %289 = vmatpush1.msra.mxu0 0.0
  %290 = vmatprep.mubr.f32.mxu0 0.0
  %291 = vmatmul.mubr.f32.gmra.mrb[0].mxu0 %v207
  %v292 = vpop.f32.mrb[0].mxu0
  %v293 = vadd.f32 0.0, %v292
  %v294 = vpop.f32.mrb[0].mxu0
  %295 = vdwg.mxu0
  %v296 = vmax.f32 %v207, %v293
  %v297 = vld [vmem:[%s5] sm:$0xff]
  %v298 = vld [vmem:[%s5 + $0x8] sm:$0xff]
  %v299 = vld [vmem:[%s5 + $0x10] sm:$0xff]
  %v300 = vld [vmem:[%s5 + $0x18] sm:$0xff]
  %v301 = vld [vmem:[%s5 + $0x20] sm:$0xff]
  %v302 = vld [vmem:[%s5 + $0x28] sm:$0xff]
  %v303 = vld [vmem:[%s5 + $0x30] sm:$0xff]
  %v304 = vld [vmem:[%s5 + $0x38] sm:$0xff]
  %v305 = vld [vmem:[%s5 + $0x40] sm:$0xff]
  %v306 = vld [vmem:[%s5 + $0x48] sm:$0xff]
  %v307 = vld [vmem:[%s5 + $0x50] sm:$0xff]
  %v308 = vld [vmem:[%s5 + $0x58] sm:$0xff]
  %v309 = vld [vmem:[%s5 + $0x60] sm:$0xff]
  %v310 = vld [vmem:[%s5 + $0x68] sm:$0xff]
  %v311 = vld [vmem:[%s5 + $0x70] sm:$0xff]
  %v312 = vld [vmem:[%s5 + $0x78] sm:$0xff]
  %313 = vmatprep.subr.mxu0 0.0
  %314 = vmatpush1.msra.mxu0 %v297
  %315 = vmatprep.subr.mxu0 0.0
  %316 = vmatpush1.msra.mxu0 %v298
  %317 = vmatprep.subr.mxu0 0.0
  %318 = vmatpush1.msra.mxu0 %v299
  %319 = vmatprep.subr.mxu0 0.0
  %320 = vmatpush1.msra.mxu0 %v300
  %321 = vmatprep.subr.mxu0 0.0
  %322 = vmatpush1.msra.mxu0 %v301
  %323 = vmatprep.subr.mxu0 0.0
  %324 = vmatpush1.msra.mxu0 %v302
  %325 = vmatprep.subr.mxu0 0.0
  %326 = vmatpush1.msra.mxu0 %v303
  %327 = vmatprep.subr.mxu0 0.0
  %328 = vmatpush1.msra.mxu0 %v304
  %329 = vmatprep.subr.mxu0 0.0
  %330 = vmatpush1.msra.mxu0 %v305
  %331 = vmatprep.subr.mxu0 0.0
  %332 = vmatpush1.msra.mxu0 %v306
  %333 = vmatprep.subr.mxu0 0.0
  %334 = vmatpush1.msra.mxu0 %v307
  %335 = vmatprep.subr.mxu0 0.0
  %336 = vmatpush1.msra.mxu0 %v308
  %337 = vmatprep.subr.mxu0 0.0
  %338 = vmatpush1.msra.mxu0 %v309
  %339 = vmatprep.subr.mxu0 0.0
  %340 = vmatpush1.msra.mxu0 %v310
  %341 = vmatprep.subr.mxu0 0.0
  %342 = vmatpush1.msra.mxu0 %v311
  %343 = vmatprep.subr.mxu0 0.0
  %344 = vmatpush1.msra.mxu0 %v312
  %345 = vmatprep.subr.mxu0 0.0
  %346 = vmatpush1.msra.mxu0 0.0
  %347 = vmatprep.subr.mxu0 0.0
  %348 = vmatpush1.msra.mxu0 0.0
  %349 = vmatprep.subr.mxu0 0.0
  %350 = vmatpush1.msra.mxu0 0.0
  %351 = vmatprep.subr.mxu0 0.0
  %352 = vmatpush1.msra.mxu0 0.0
  %353 = vmatprep.subr.mxu0 0.0
  %354 = vmatpush1.msra.mxu0 0.0
  %355 = vmatprep.subr.mxu0 0.0
  %356 = vmatpush1.msra.mxu0 0.0
  %357 = vmatprep.subr.mxu0 0.0
  %358 = vmatpush1.msra.mxu0 0.0
  %359 = vmatprep.subr.mxu0 0.0
  %360 = vmatpush1.msra.mxu0 0.0
  %361 = vmatprep.subr.mxu0 0.0
  %362 = vmatpush1.msra.mxu0 0.0
  %363 = vmatprep.subr.mxu0 0.0
  %364 = vmatpush1.msra.mxu0 0.0
  %365 = vmatprep.subr.mxu0 0.0
  %366 = vmatpush1.msra.mxu0 0.0
  %367 = vmatprep.subr.mxu0 0.0
  %368 = vmatpush1.msra.mxu0 0.0
  %369 = vmatprep.subr.mxu0 0.0
  %370 = vmatpush1.msra.mxu0 0.0
  %371 = vmatprep.subr.mxu0 0.0
  %372 = vmatpush1.msra.mxu0 0.0
  %373 = vmatprep.subr.mxu0 0.0
  %374 = vmatpush1.msra.mxu0 0.0
  %375 = vmatprep.subr.mxu0 0.0
  %376 = vmatpush1.msra.mxu0 0.0
  %377 = vmatprep.mubr.f32.mxu0 0.0
  %378 = vmatmul.mubr.f32.gmra.mrb[0].mxu0 %v296
  %v379 = vpop.f32.mrb[0].mxu0
  %v380 = vadd.f32 0.0, %v379
  %v381 = vpop.f32.mrb[0].mxu0
  %382 = vdwg.mxu0
  %v383 = vmax.f32 %v296, %v380
  %v384 = vsub.f32 %v207, %v383
  %v385 = vmul.f32 %v384, 1.442695
  %v386 = vpow.pop %v385
  %v387 = vld [vmem:[%s6] sm:$0xff]
  %v388 = vld [vmem:[%s6 + $0x8] sm:$0xff]
  %v389 = vld [vmem:[%s6 + $0x10] sm:$0xff]
  %v390 = vld [vmem:[%s6 + $0x18] sm:$0xff]
  %v391 = vld [vmem:[%s6 + $0x20] sm:$0xff]
  %v392 = vld [vmem:[%s6 + $0x28] sm:$0xff]
  %v393 = vld [vmem:[%s6 + $0x30] sm:$0xff]
  %v394 = vld [vmem:[%s6 + $0x38] sm:$0xff]
  %v395 = vld [vmem:[%s6 + $0x40] sm:$0xff]
  %v396 = vld [vmem:[%s6 + $0x48] sm:$0xff]
  %v397 = vld [vmem:[%s6 + $0x50] sm:$0xff]
  %v398 = vld [vmem:[%s6 + $0x58] sm:$0xff]
  %v399 = vld [vmem:[%s6 + $0x60] sm:$0xff]
  %v400 = vld [vmem:[%s6 + $0x68] sm:$0xff]
  %v401 = vld [vmem:[%s6 + $0x70] sm:$0xff]
  %v402 = vld [vmem:[%s6 + $0x78] sm:$0xff]
  %403 = vmatprep.subr.mxu0 0.0
  %404 = vmatpush1.msra.mxu0 %v387
  %405 = vmatprep.subr.mxu0 0.0
  %406 = vmatpush1.msra.mxu0 %v388
  %407 = vmatprep.subr.mxu0 0.0
  %408 = vmatpush1.msra.mxu0 %v389
  %409 = vmatprep.subr.mxu0 0.0
  %410 = vmatpush1.msra.mxu0 %v390
  %411 = vmatprep.subr.mxu0 0.0
  %412 = vmatpush1.msra.mxu0 %v391
  %413 = vmatprep.subr.mxu0 0.0
  %414 = vmatpush1.msra.mxu0 %v392
  %415 = vmatprep.subr.mxu0 0.0
  %416 = vmatpush1.msra.mxu0 %v393
  %417 = vmatprep.subr.mxu0 0.0
  %418 = vmatpush1.msra.mxu0 %v394
  %419 = vmatprep.subr.mxu0 0.0
  %420 = vmatpush1.msra.mxu0 %v395
  %421 = vmatprep.subr.mxu0 0.0
  %422 = vmatpush1.msra.mxu0 %v396
  %423 = vmatprep.subr.mxu0 0.0
  %424 = vmatpush1.msra.mxu0 %v397
  %425 = vmatprep.subr.mxu0 0.0
  %426 = vmatpush1.msra.mxu0 %v398
  %427 = vmatprep.subr.mxu0 0.0
  %428 = vmatpush1.msra.mxu0 %v399
  %429 = vmatprep.subr.mxu0 0.0
  %430 = vmatpush1.msra.mxu0 %v400
  %431 = vmatprep.subr.mxu0 0.0
  %432 = vmatpush1.msra.mxu0 %v401
  %433 = vmatprep.subr.mxu0 0.0
  %434 = vmatpush1.msra.mxu0 %v402
  %435 = vmatprep.subr.mxu0 0.0
  %436 = vmatpush1.msra.mxu0 0.0
  %437 = vmatprep.subr.mxu0 0.0
  %438 = vmatpush1.msra.mxu0 0.0
  %439 = vmatprep.subr.mxu0 0.0
  %440 = vmatpush1.msra.mxu0 0.0
  %441 = vmatprep.subr.mxu0 0.0
  %442 = vmatpush1.msra.mxu0 0.0
  %443 = vmatprep.subr.mxu0 0.0
  %444 = vmatpush1.msra.mxu0 0.0
  %445 = vmatprep.subr.mxu0 0.0
  %446 = vmatpush1.msra.mxu0 0.0
  %447 = vmatprep.subr.mxu0 0.0
  %448 = vmatpush1.msra.mxu0 0.0
  %449 = vmatprep.subr.mxu0 0.0
  %450 = vmatpush1.msra.mxu0 0.0
  %451 = vmatprep.subr.mxu0 0.0
  %452 = vmatpush1.msra.mxu0 0.0
  %453 = vmatprep.subr.mxu0 0.0
  %454 = vmatpush1.msra.mxu0 0.0
  %455 = vmatprep.subr.mxu0 0.0
  %456 = vmatpush1.msra.mxu0 0.0
  %457 = vmatprep.subr.mxu0 0.0
  %458 = vmatpush1.msra.mxu0 0.0
  %459 = vmatprep.subr.mxu0 0.0
  %460 = vmatpush1.msra.mxu0 0.0
  %461 = vmatprep.subr.mxu0 0.0
  %462 = vmatpush1.msra.mxu0 0.0
  %463 = vmatprep.subr.mxu0 0.0
  %464 = vmatpush1.msra.mxu0 0.0
  %465 = vmatprep.subr.mxu0 0.0
  %466 = vmatpush1.msra.mxu0 0.0
  %467 = vmatprep.mubr.f32.mxu0 0.0
  %468 = vmatmul.mubr.f32.gmra.mrb[0].mxu0 %v386
  %v469 = vpop.f32.mrb[0].mxu0
  %v470 = vadd.f32 0.0, %v469
  %v471 = vpop.f32.mrb[0].mxu0
  %472 = vdwg.mxu0
  %v473 = vrcp.pop %v470
  %v474 = vmul.f32 %v386, %v473
  %475 = vst [vmem:[%s7] sm:$0xff] %v474
  // Predicated region
  $region30: #{mcgate_forward.1} parent=0 // pred_check
    _
  $region31: #{mcgate_forward.1} parent=0 // pred_check_branch
    %477 = sbr.rel (0) target = $region33
  $region32: #{mcgate_forward.1} parent=0 // pred_region
    _
  $region33: #{mcgate_forward.1} parent=0 // pred_fallthru
    _
  // Predicated region
  $region34: #{mcgate_forward.1} parent=0 // pred_check
    _
  $region35: #{mcgate_forward.1} parent=0 // pred_check_branch
    %479 = sbr.rel (0) target = $region37
  $region36: #{mcgate_forward.1} parent=0 // pred_region
    _
  $region37: #{mcgate_forward.1} parent=0 // pred_fallthru
    _

</llo_original>
